<compile_context>
chip_gen: v7x
topology: tpu7x:2x2x1
jax: 0.10.0
libtpu: 0.0.40
codegen_flags: <defaults>
</compile_context>

<pallas_src>
import functools

import jax
import jax.numpy as jnp
from jax import lax
from jax.experimental import pallas as pl
from jax.experimental.pallas import tpu as pltpu

BN_EPS = 1e-5


def _round_up(x, m):
    return ((x + m - 1) // m) * m


# ----------------------------- fused Pallas kernel ------------------------------

def _fused_conv_bn_relu_kernel(p_ref, w_ref, gb_ref, o_ref):
    """Conv (as matmul) + BatchNorm2d (training batch stats) + ReLU, fully fused.

    p_ref : (M, K_pad)     im2col patches (K zero-padded to a multiple of 8 only)
    w_ref : (K_pad, C_pad) reshaped conv weights (zero-padded along K and C_out)
    gb_ref: (2, C_pad)     row 0 = BN gamma, row 1 = BN beta (zero-padded along C_out)
    o_ref : (M, C_pad)     output (lane-dense store; live channels sliced in wrapper)
    """
    # Conv = matmul on the MXU with f32 accumulation.  The conv bias is intentionally
    # omitted: a per-channel constant added before training-mode BatchNorm is cancelled
    # exactly by the batch-mean subtraction (NOT valid for eval/running-stat BN).
    y = jnp.dot(p_ref[...], w_ref[...], preferred_element_type=jnp.float32)

    # One-pass BatchNorm2d training statistics over the N*H_out*W_out rows, per
    # channel (channel = lane axis -> cheap cross-sublane reductions).
    inv_m = 1.0 / y.shape[0]
    mean = jnp.sum(y, axis=0, keepdims=True) * inv_m
    ex2 = jnp.sum(y * y, axis=0, keepdims=True) * inv_m
    var = jnp.maximum(ex2 - mean * mean, 0.0)          # clamp: guards tiny cancellation

    scale = gb_ref[0:1, :] * lax.rsqrt(var + BN_EPS)   # gamma / sqrt(var + eps)  (EUP)
    shift = gb_ref[1:2, :] - mean * scale              # beta  - mean * scale
    o_ref[...] = jnp.maximum(y * scale + shift, 0.0).astype(o_ref.dtype)


# ------------------------------ glue (im2col, NHWC) -------------------------------

def _im2col_nhwc(x_nchw, kernel_size, stride, padding):
    """NCHW input -> im2col patches (M, K) with K ordered (kh, kw, C_in)."""
    n, c, h, w = x_nchw.shape
    k = kernel_size
    h_out = (h + 2 * padding - k) // stride + 1
    w_out = (w + 2 * padding - k) // stride + 1
    x = x_nchw.transpose(0, 2, 3, 1)                                    # NHWC
    xp = jnp.pad(x, ((0, 0), (padding, padding), (padding, padding), (0, 0)))
    cols = []
    for kh in range(k):
        for kw in range(k):
            cols.append(xp[:, kh:kh + (h_out - 1) * stride + 1:stride,
                              kw:kw + (w_out - 1) * stride + 1:stride, :])
    patches = jnp.concatenate(cols, axis=-1)                            # (N,Ho,Wo,k*k*C)
    return patches.reshape(n * h_out * w_out, k * k * c), h_out, w_out


# ------------------------------ module wrapper -------------------------------

@functools.partial(jax.jit, static_argnames=("kernel_size", "stride"))
def single_conv_block(x, conv_w, conv_b, bn_gamma, bn_beta, *, kernel_size, stride):
    """Forward of SingleConvBlock (drop_rate=None).  x: NCHW float32, returns NCHW."""
    del conv_b  # exactly cancelled by training-mode BatchNorm mean subtraction (see top)
    n, c_in, _, _ = x.shape
    c_out = conv_w.shape[0]
    k = kernel_size
    padding = (k - 1) // 2

    # TODO(synk): for large H/W replace this XLA im2col (k*k x input-HBM expansion)
    # with in-kernel shifted matmuls: pass the padded NHWC input as one VMEM block
    # (or memory_space=pl.ANY + manual DMA), pl.ds-slice per (kh, kw) and accumulate
    # k*k dots into the f32 result ahead of the fused BN.
    patches, h_out, w_out = _im2col_nhwc(x, k, stride, padding)
    m, kk = patches.shape

    # K padded only to a sublane multiple (Mosaic pads lanes internally, no HBM cost);
    # C_out padded to 128 so MXU result / VPU ops / output store are lane-dense.
    k_pad = _round_up(kk, 8)
    c_pad = _round_up(c_out, 128)

    patches = jnp.pad(patches, ((0, 0), (0, k_pad - kk)))
    w2d = conv_w.transpose(2, 3, 1, 0).reshape(kk, c_out)               # K = (kh, kw, Cin)
    w2d = jnp.pad(w2d, ((0, k_pad - kk), (0, c_pad - c_out)))
    gb = jnp.stack([jnp.pad(bn_gamma, (0, c_pad - c_out)),
                    jnp.pad(bn_beta, (0, c_pad - c_out))])              # (2, C_pad)

    # Gridless single invocation: whole problem resident in VMEM.  Budget check is
    # device-aware (v7x: 64 MiB vs 128 MiB on v5e/v6e) and counts pipeline
    # double-buffers plus the in-kernel f32 temporaries (y + one elementwise pass).
    itemsize = 4
    io_block_bytes = itemsize * (m * k_pad + k_pad * c_pad + 2 * c_pad + m * c_pad)
    vmem_needed = 2 * io_block_bytes + itemsize * 2 * m * c_pad
    try:
        vmem_cap = pltpu.get_tpu_info().vmem_capacity_bytes
    except Exception:  # fallback off-TPU / older runtimes: assume smallest (v7x 64 MiB)
        vmem_cap = 64 << 20
    assert vmem_needed <= vmem_cap // 2, (
        "fused gridless path is sized for small feature maps; tile over M instead "
        "(TODO(synk): M-tiled path with per-tile sum/sumsq accumulation + combine, "
        "'parallel' M axis for v7x megacore, tn=tk=256 on v6e/v7x and 128 on v5e)")
    # Explicit scoped-VMEM limit (v5e default is only 16 MiB) with headroom.
    vmem_limit = int(min(vmem_cap * 3 // 4, max(vmem_needed + (8 << 20), 16 << 20)))

    y = pl.pallas_call(
        _fused_conv_bn_relu_kernel,
        out_shape=jax.ShapeDtypeStruct((m, c_pad), jnp.float32),
        in_specs=[
            pl.BlockSpec((m, k_pad), lambda: (0, 0)),
            pl.BlockSpec((k_pad, c_pad), lambda: (0, 0)),
            pl.BlockSpec((2, c_pad), lambda: (0, 0)),
        ],
        out_specs=pl.BlockSpec((m, c_pad), lambda: (0, 0)),
        compiler_params=pltpu.CompilerParams(vmem_limit_bytes=vmem_limit),
    )(patches, w2d, gb)

    # TODO(synk): Dropout2d path not implemented (drop_rate=None in this instantiation).
    # TODO(synk): optionally cast patches/w2d to bf16 (keep f32 MXU accumulation and
    # f32 BN math) to halve patch DMA bytes and double MXU rate on v6e/v7x; kept f32
    # here to hold the 1e-3 reference tolerance.

    # (M, C_pad) -> slice live channels -> NCHW (module contract is NCHW).
    return y[:, :c_out].reshape(n, h_out, w_out, c_out).transpose(0, 3, 1, 2)


# ------------------------------ reference (pure JAX) -------------------------------

def reference(x, conv_w, conv_b, bn_gamma, bn_beta, kernel_size, stride):
    padding = (kernel_size - 1) // 2
    y = lax.conv_general_dilated(
        x, conv_w, window_strides=(stride, stride),
        padding=((padding, padding), (padding, padding)),
        dimension_numbers=("NCHW", "OIHW", "NCHW"))
    y = y + conv_b.reshape(1, -1, 1, 1)
    mean = jnp.mean(y, axis=(0, 2, 3), keepdims=True)
    var = jnp.mean((y - mean) ** 2, axis=(0, 2, 3), keepdims=True)
    y = (y - mean) * lax.rsqrt(var + BN_EPS)
    y = y * bn_gamma.reshape(1, -1, 1, 1) + bn_beta.reshape(1, -1, 1, 1)
    return jnp.maximum(y, 0.0)


if __name__ == "__main__":
    # SingleConvBlock(in_channels=4, out_channels=8, kernel_size=3, drop_rate=None, stride=1)
    N, C_IN, H, W = 2, 4, 16, 16
    C_OUT, K, STRIDE = 8, 3, 1

    key = jax.random.PRNGKey(0)
    kx, kw_, kb = jax.random.split(key, 3)
    x = jax.random.normal(kx, (N, C_IN, H, W), dtype=jnp.float32)
    # Conv2d params (deterministic synthetic init, Kaiming-ish scale)
    fan_in = C_IN * K * K
    conv_w = jax.random.normal(kw_, (C_OUT, C_IN, K, K), dtype=jnp.float32) / jnp.sqrt(fan_in)
    conv_b = jax.random.normal(kb, (C_OUT,), dtype=jnp.float32) * 0.1
    # BatchNorm2d params (PyTorch default init: weight=1, bias=0)
    bn_gamma = jnp.ones((C_OUT,), dtype=jnp.float32)
    bn_beta = jnp.zeros((C_OUT,), dtype=jnp.float32)

    out = single_conv_block(x, conv_w, conv_b, bn_gamma, bn_beta,
                            kernel_size=K, stride=STRIDE)
    out = jax.block_until_ready(out)

    ref = reference(x, conv_w, conv_b, bn_gamma, bn_beta, K, STRIDE)
    assert out.shape == (N, C_OUT, H, W), out.shape
    assert jnp.allclose(out, ref, atol=1e-3, rtol=1e-3), \
        float(jnp.max(jnp.abs(out - ref)))

    print("KERNEL_OK")
</pallas_src>

<mosaic_0001>
module attributes {stable_mosaic.version = 11 : i64} {
  func.func @_fused_conv_bn_relu_kernel(%arg0: memref<512x40xf32, #tpu.memory_space<vmem>>, %arg1: memref<40x128xf32, #tpu.memory_space<vmem>>, %arg2: memref<2x128xf32, #tpu.memory_space<vmem>>, %arg3: memref<512x128xf32, #tpu.memory_space<vmem>>) attributes {dimension_semantics = [], scalar_prefetch = 0 : i64, scratch_operands = 0 : i64, tpu.core_type = #tpu.core_type<tc>} {
    %c0 = arith.constant 0 : index
    %c0_0 = arith.constant 0 : index
    %0 = vector.load %arg0[%c0, %c0_0] : memref<512x40xf32, #tpu.memory_space<vmem>>, vector<512x40xf32>
    %c0_1 = arith.constant 0 : index
    %c0_2 = arith.constant 0 : index
    %1 = vector.load %arg1[%c0_1, %c0_2] : memref<40x128xf32, #tpu.memory_space<vmem>>, vector<40x128xf32>
    %cst = arith.constant dense<0.000000e+00> : vector<512x128xf32>
    %2 = tpu.matmul %0, %1, %cst {dimension_numbers = #tpu.dot_dimension_numbers<[1], [0], [0], [1], [0, 0, 1, 1], [], []>} : vector<512x40xf32>, vector<40x128xf32>, vector<512x128xf32> -> vector<512x128xf32>
    %cst_3 = arith.constant dense<0.000000e+00> : vector<128xf32>
    %3 = vector.multi_reduction <add>, %2, %cst_3 [0] : vector<512x128xf32> to vector<128xf32>
    %4 = vector.shape_cast %3 : vector<128xf32> to vector<1x128xf32>
    %cst_4 = arith.constant 0.001953125 : f32
    %5 = vector.broadcast %cst_4 : f32 to vector<1x128xf32>
    %6 = arith.mulf %4, %5 : vector<1x128xf32>
    %7 = arith.mulf %2, %2 : vector<512x128xf32>
    %cst_5 = arith.constant dense<0.000000e+00> : vector<128xf32>
    %8 = vector.multi_reduction <add>, %7, %cst_5 [0] : vector<512x128xf32> to vector<128xf32>
    %9 = vector.shape_cast %8 : vector<128xf32> to vector<1x128xf32>
    %cst_6 = arith.constant 0.001953125 : f32
    %10 = vector.broadcast %cst_6 : f32 to vector<1x128xf32>
    %11 = arith.mulf %9, %10 : vector<1x128xf32>
    %12 = arith.mulf %6, %6 : vector<1x128xf32>
    %13 = arith.subf %11, %12 : vector<1x128xf32>
    %cst_7 = arith.constant 0.000000e+00 : f32
    %14 = vector.broadcast %cst_7 : f32 to vector<1x128xf32>
    %15 = arith.maximumf %13, %14 : vector<1x128xf32>
    %c0_8 = arith.constant 0 : index
    %c0_9 = arith.constant 0 : index
    %16 = vector.load %arg2[%c0_8, %c0_9] : memref<2x128xf32, #tpu.memory_space<vmem>>, vector<1x128xf32>
    %cst_10 = arith.constant 9.99999974E-6 : f32
    %17 = vector.broadcast %cst_10 : f32 to vector<1x128xf32>
    %18 = arith.addf %15, %17 : vector<1x128xf32>
    %19 = math.rsqrt %18 : vector<1x128xf32>
    %20 = arith.mulf %16, %19 : vector<1x128xf32>
    %c1 = arith.constant 1 : index
    %c0_11 = arith.constant 0 : index
    %21 = vector.load %arg2[%c1, %c0_11] : memref<2x128xf32, #tpu.memory_space<vmem>>, vector<1x128xf32>
    %22 = arith.mulf %6, %20 : vector<1x128xf32>
    %23 = arith.subf %21, %22 : vector<1x128xf32>
    %24 = vector.broadcast %20 : vector<1x128xf32> to vector<512x128xf32>
    %25 = arith.mulf %2, %24 : vector<512x128xf32>
    %26 = vector.broadcast %23 : vector<1x128xf32> to vector<512x128xf32>
    %27 = arith.addf %25, %26 : vector<512x128xf32>
    %cst_12 = arith.constant 0.000000e+00 : f32
    %28 = vector.broadcast %cst_12 : f32 to vector<512x128xf32>
    %29 = arith.maximumf %27, %28 : vector<512x128xf32>
    %c0_13 = arith.constant 0 : index
    %c0_14 = arith.constant 0 : index
    %30 = vector.load %arg3[%c0_13, %c0_14] : memref<512x128xf32, #tpu.memory_space<vmem>>, vector<512x128xf32>
    tpu.vector_store %arg3[%c0_13, %c0_14], %29 {strides = array<i32>} : memref<512x128xf32, #tpu.memory_space<vmem>>, vector<512x128xf32>,
    return
  }
}

</mosaic_0001>

<llo_original>
// kernel: single_conv_block.1
$region0: #{single_conv_block.1}
  #allocation0 [shape = 'u32[]', space=smem, size = 0x4, offset = 0x4, fixed_abs, tag = 'smem constant byte address 0x4 - core index']
  #allocation1 [shape = 'u32[144,128]{1,0:T(1,128)}', space=vmem, size = 0x12000, scoped, tag = 'internal scratch']
  %s0 = inlined_call_operand.vmem [shape: f32[512,40], index: 0, kind: input, shape index: {}]
  %s1 = inlined_call_operand.vmem [shape: f32[40,128], index: 1, kind: input, shape index: {}]
  %s2 = inlined_call_operand.vmem [shape: f32[2,128], index: 2, kind: input, shape index: {}]
  %s3 = inlined_call_operand.vmem [shape: f32[512,128], index: 3, kind: output, shape index: {}]
  %s4 = sld [smem:[#allocation0]]
  $region22: #{single_conv_block.1} parent=0
    _
  %s6 = ssub.s32 1, %s4
  %s7 = scalar_select 0, %s6, %s4
  // Predicated region
  $region2: #{single_conv_block.1} parent=0 // pred_check
    _
  $region3: #{single_conv_block.1} parent=0 // pred_check_branch
    %9 = sbr.rel (0) target = $region5
  $region4: #{single_conv_block.1} parent=0 // pred_region
    _
  $region5: #{single_conv_block.1} parent=0 // pred_fallthru
    _
  // Predicated region
  $region6: #{single_conv_block.1} parent=0 // pred_check
    _
  $region7: #{single_conv_block.1} parent=0 // pred_check_branch
    %11 = sbr.rel (0) target = $region9
  $region8: #{single_conv_block.1} parent=0 // pred_region
    _
  $region9: #{single_conv_block.1} parent=0 // pred_fallthru
    _
  // Predicated region
  $region10: #{single_conv_block.1} parent=0 // pred_check
    _
  $region11: #{single_conv_block.1} parent=0 // pred_check_branch
    %13 = sbr.rel (0) target = $region13
  $region12: #{single_conv_block.1} parent=0 // pred_region
    _
  $region13: #{single_conv_block.1} parent=0 // pred_fallthru
    _
  %v14 = vld [vmem:[%s0] sm:$0xff]
  %v15 = vld [vmem:[%s0 + $0x8] sm:$0xff]
  %v16 = vld [vmem:[%s0 + $0x10] sm:$0xff]
  %v17 = vld [vmem:[%s0 + $0x18] sm:$0xff]
  %v18 = vld [vmem:[%s0 + $0x20] sm:$0xff]
  %v19 = vld [vmem:[%s0 + $0x28] sm:$0xff]
  %v20 = vld [vmem:[%s0 + $0x30] sm:$0xff]
  %v21 = vld [vmem:[%s0 + $0x38] sm:$0xff]
  %v22 = vld [vmem:[%s0 + $0x40] sm:$0xff]
  %v23 = vld [vmem:[%s0 + $0x48] sm:$0xff]
  %v24 = vld [vmem:[%s0 + $0x50] sm:$0xff]
  %v25 = vld [vmem:[%s0 + $0x58] sm:$0xff]
  %v26 = vld [vmem:[%s0 + $0x60] sm:$0xff]
  %v27 = vld [vmem:[%s0 + $0x68] sm:$0xff]
  %v28 = vld [vmem:[%s0 + $0x70] sm:$0xff]
  %v29 = vld [vmem:[%s0 + $0x78] sm:$0xff]
  %v30 = vld [vmem:[%s0 + $0x80] sm:$0xff]
  %v31 = vld [vmem:[%s0 + $0x88] sm:$0xff]
  %v32 = vld [vmem:[%s0 + $0x90] sm:$0xff]
  %v33 = vld [vmem:[%s0 + $0x98] sm:$0xff]
  %v34 = vld [vmem:[%s0 + $0xa0] sm:$0xff]
  %v35 = vld [vmem:[%s0 + $0xa8] sm:$0xff]
  %v36 = vld [vmem:[%s0 + $0xb0] sm:$0xff]
  %v37 = vld [vmem:[%s0 + $0xb8] sm:$0xff]
  %v38 = vld [vmem:[%s0 + $0xc0] sm:$0xff]
  %v39 = vld [vmem:[%s0 + $0xc8] sm:$0xff]
  %v40 = vld [vmem:[%s0 + $0xd0] sm:$0xff]
  %v41 = vld [vmem:[%s0 + $0xd8] sm:$0xff]
  %v42 = vld [vmem:[%s0 + $0xe0] sm:$0xff]
  %v43 = vld [vmem:[%s0 + $0xe8] sm:$0xff]
  %v44 = vld [vmem:[%s0 + $0xf0] sm:$0xff]
  %v45 = vld [vmem:[%s0 + $0xf8] sm:$0xff]
  %v46 = vld [vmem:[%s0 + $0x100] sm:$0xff]
  %v47 = vld [vmem:[%s0 + $0x108] sm:$0xff]
  %v48 = vld [vmem:[%s0 + $0x110] sm:$0xff]
  %v49 = vld [vmem:[%s0 + $0x118] sm:$0xff]
  %v50 = vld [vmem:[%s0 + $0x120] sm:$0xff]
  %v51 = vld [vmem:[%s0 + $0x128] sm:$0xff]
  %v52 = vld [vmem:[%s0 + $0x130] sm:$0xff]
  %v53 = vld [vmem:[%s0 + $0x138] sm:$0xff]
  %v54 = vld [vmem:[%s0 + $0x140] sm:$0xff]
  %v55 = vld [vmem:[%s0 + $0x148] sm:$0xff]
  %v56 = vld [vmem:[%s0 + $0x150] sm:$0xff]
  %v57 = vld [vmem:[%s0 + $0x158] sm:$0xff]
  %v58 = vld [vmem:[%s0 + $0x160] sm:$0xff]
  %v59 = vld [vmem:[%s0 + $0x168] sm:$0xff]
  %v60 = vld [vmem:[%s0 + $0x170] sm:$0xff]
  %v61 = vld [vmem:[%s0 + $0x178] sm:$0xff]
  %v62 = vld [vmem:[%s0 + $0x180] sm:$0xff]
  %v63 = vld [vmem:[%s0 + $0x188] sm:$0xff]
  %v64 = vld [vmem:[%s0 + $0x190] sm:$0xff]
  %v65 = vld [vmem:[%s0 + $0x198] sm:$0xff]
  %v66 = vld [vmem:[%s0 + $0x1a0] sm:$0xff]
  %v67 = vld [vmem:[%s0 + $0x1a8] sm:$0xff]
  %v68 = vld [vmem:[%s0 + $0x1b0] sm:$0xff]
  %v69 = vld [vmem:[%s0 + $0x1b8] sm:$0xff]
  %v70 = vld [vmem:[%s0 + $0x1c0] sm:$0xff]
  %v71 = vld [vmem:[%s0 + $0x1c8] sm:$0xff]
  %v72 = vld [vmem:[%s0 + $0x1d0] sm:$0xff]
  %v73 = vld [vmem:[%s0 + $0x1d8] sm:$0xff]
  %v74 = vld [vmem:[%s0 + $0x1e0] sm:$0xff]
  %v75 = vld [vmem:[%s0 + $0x1e8] sm:$0xff]
  %v76 = vld [vmem:[%s0 + $0x1f0] sm:$0xff]
  %v77 = vld [vmem:[%s0 + $0x1f8] sm:$0xff]
  %v78 = vld [vmem:[%s1] sm:$0xff]
  %v79 = vld [vmem:[%s1 + $0x8] sm:$0xff]
  %v80 = vld [vmem:[%s1 + $0x10] sm:$0xff]
  %v81 = vld [vmem:[%s1 + $0x18] sm:$0xff]
  %v82 = vld [vmem:[%s1 + $0x20] sm:$0xff]
  %vm83 = vcmask 326656
  %v85 = vsel %vm83, %v14, 0
  %v88 = vsel %vm83, %v15, 0
  %v91 = vsel %vm83, %v16, 0
  %v94 = vsel %vm83, %v17, 0
  %v97 = vsel %vm83, %v18, 0
  %v100 = vsel %vm83, %v19, 0
  %v103 = vsel %vm83, %v20, 0
  %v106 = vsel %vm83, %v21, 0
  %v109 = vsel %vm83, %v22, 0
  %v112 = vsel %vm83, %v23, 0
  %v115 = vsel %vm83, %v24, 0
  %v118 = vsel %vm83, %v25, 0
  %v121 = vsel %vm83, %v26, 0
  %v124 = vsel %vm83, %v27, 0
  %v127 = vsel %vm83, %v28, 0
  %v130 = vsel %vm83, %v29, 0
  %v133 = vsel %vm83, %v30, 0
  %v136 = vsel %vm83, %v31, 0
  %v139 = vsel %vm83, %v32, 0
  %v142 = vsel %vm83, %v33, 0
  %v145 = vsel %vm83, %v34, 0
  %v148 = vsel %vm83, %v35, 0
  %v151 = vsel %vm83, %v36, 0
  %v154 = vsel %vm83, %v37, 0
  %v157 = vsel %vm83, %v38, 0
  %v160 = vsel %vm83, %v39, 0
  %v163 = vsel %vm83, %v40, 0
  %v166 = vsel %vm83, %v41, 0
  %v169 = vsel %vm83, %v42, 0
  %v172 = vsel %vm83, %v43, 0
  %v175 = vsel %vm83, %v44, 0
  %v178 = vsel %vm83, %v45, 0
  %v181 = vsel %vm83, %v46, 0
  %v184 = vsel %vm83, %v47, 0
  %v187 = vsel %vm83, %v48, 0
  %v190 = vsel %vm83, %v49, 0
  %v193 = vsel %vm83, %v50, 0
  %v196 = vsel %vm83, %v51, 0
  %v199 = vsel %vm83, %v52, 0
  %v202 = vsel %vm83, %v53, 0
  %v205 = vsel %vm83, %v54, 0
  %v208 = vsel %vm83, %v55, 0
  %v211 = vsel %vm83, %v56, 0
  %v214 = vsel %vm83, %v57, 0
  %v217 = vsel %vm83, %v58, 0
  %v220 = vsel %vm83, %v59, 0
  %v223 = vsel %vm83, %v60, 0
  %v226 = vsel %vm83, %v61, 0
  %v229 = vsel %vm83, %v62, 0
  %v232 = vsel %vm83, %v63, 0
  %v235 = vsel %vm83, %v64, 0
  %v238 = vsel %vm83, %v65, 0
  %v241 = vsel %vm83, %v66, 0
  %v244 = vsel %vm83, %v67, 0
  %v247 = vsel %vm83, %v68, 0
  %v250 = vsel %vm83, %v69, 0
  %v253 = vsel %vm83, %v70, 0
  %v256 = vsel %vm83, %v71, 0
  %v259 = vsel %vm83, %v72, 0
  %v262 = vsel %vm83, %v73, 0
  %v265 = vsel %vm83, %v74, 0
  %v268 = vsel %vm83, %v75, 0
  %v271 = vsel %vm83, %v76, 0
  %v274 = vsel %vm83, %v77, 0
  %276 = vmatprep.subr.mxu0 0.0
  %277 = vmatpush1.msra.mxu0 %v78
  %278 = vmatprep.subr.mxu0 0.0
  %279 = vmatpush1.msra.mxu0 %v79
  %280 = vmatprep.subr.mxu0 0.0
  %281 = vmatpush1.msra.mxu0 %v80
  %282 = vmatprep.subr.mxu0 0.0
  %283 = vmatpush1.msra.mxu0 %v81
  %284 = vmatprep.subr.mxu0 0.0
  %285 = vmatpush1.msra.mxu0 %v82
  %286 = vmatprep.subr.mxu0 0.0
  %287 = vmatpush1.msra.mxu0 0.0
  %288 = vmatprep.subr.mxu0 0.0
  %289 = vmatpush1.msra.mxu0 0.0
  %290 = vmatprep.subr.mxu0 0.0
  %291 = vmatpush1.msra.mxu0 0.0
  %292 = vmatprep.subr.mxu0 0.0
  %293 = vmatpush1.msra.mxu0 0.0
  %294 = vmatprep.subr.mxu0 0.0
  %295 = vmatpush1.msra.mxu0 0.0
  %296 = vmatprep.subr.mxu0 0.0
  %297 = vmatpush1.msra.mxu0 0.0
  %298 = vmatprep.subr.mxu0 0.0
  %299 = vmatpush1.msra.mxu0 0.0
  %300 = vmatprep.subr.mxu0 0.0
  %301 = vmatpush1.msra.mxu0 0.0
  %302 = vmatprep.subr.mxu0 0.0
  %303 = vmatpush1.msra.mxu0 0.0
  %304 = vmatprep.subr.mxu0 0.0
  %305 = vmatpush1.msra.mxu0 0.0
  %306 = vmatprep.subr.mxu0 0.0
  %307 = vmatpush1.msra.mxu0 0.0
  %308 = vmatprep.subr.mxu0 0.0
  %309 = vmatpush1.msra.mxu0 0.0
  %310 = vmatprep.subr.mxu0 0.0
  %311 = vmatpush1.msra.mxu0 0.0
  %312 = vmatprep.subr.mxu0 0.0
  %313 = vmatpush1.msra.mxu0 0.0
  %314 = vmatprep.subr.mxu0 0.0
  %315 = vmatpush1.msra.mxu0 0.0
  %316 = vmatprep.subr.mxu0 0.0
  %317 = vmatpush1.msra.mxu0 0.0
  %318 = vmatprep.subr.mxu0 0.0
  %319 = vmatpush1.msra.mxu0 0.0
  %320 = vmatprep.subr.mxu0 0.0
  %321 = vmatpush1.msra.mxu0 0.0
  %322 = vmatprep.subr.mxu0 0.0
  %323 = vmatpush1.msra.mxu0 0.0
  %324 = vmatprep.subr.mxu0 0.0
  %325 = vmatpush1.msra.mxu0 0.0
  %326 = vmatprep.subr.mxu0 0.0
  %327 = vmatpush1.msra.mxu0 0.0
  %328 = vmatprep.subr.mxu0 0.0
  %329 = vmatpush1.msra.mxu0 0.0
  %330 = vmatprep.subr.mxu0 0.0
  %331 = vmatpush1.msra.mxu0 0.0
  %332 = vmatprep.subr.mxu0 0.0
  %333 = vmatpush1.msra.mxu0 0.0
  %334 = vmatprep.subr.mxu0 0.0
  %335 = vmatpush1.msra.mxu0 0.0
  %336 = vmatprep.subr.mxu0 0.0
  %337 = vmatpush1.msra.mxu0 0.0
  %338 = vmatprep.subr.mxu0 0.0
  %339 = vmatpush1.msra.mxu0 0.0
  %340 = vmatprep.mubr.f32.mxu0 0.0
  %341 = vmatmul.mubr.f32.gmra.mrb[0].mxu0 %v85
  %v342 = vpop.f32.mrb[0].mxu0
  %v343 = vadd.f32 0.0, %v342
  %v344 = vpop.f32.mrb[0].mxu0
  %345 = vmatprep.mubr.f32.mxu0 0.0
  %346 = vmatmul.mubr.f32.gmra.mrb[0].mxu0 %v88
  %v347 = vpop.f32.mrb[0].mxu0
  %v348 = vadd.f32 0.0, %v347
  %v349 = vpop.f32.mrb[0].mxu0
  %350 = vmatprep.mubr.f32.mxu0 0.0
  %351 = vmatmul.mubr.f32.gmra.mrb[0].mxu0 %v91
  %v352 = vpop.f32.mrb[0].mxu0
  %v353 = vadd.f32 0.0, %v352
  %v354 = vpop.f32.mrb[0].mxu0
  %355 = vmatprep.mubr.f32.mxu0 0.0
  %356 = vmatmul.mubr.f32.gmra.mrb[0].mxu0 %v94
  %v357 = vpop.f32.mrb[0].mxu0
  %v358 = vadd.f32 0.0, %v357
  %v359 = vpop.f32.mrb[0].mxu0
  %360 = vmatprep.mubr.f32.mxu0 0.0
  %361 = vmatmul.mubr.f32.gmra.mrb[0].mxu0 %v97
  %v362 = vpop.f32.mrb[0].mxu0
  %v363 = vadd.f32 0.0, %v362
  %v364 = vpop.f32.mrb[0].mxu0
  %365 = vmatprep.mubr.f32.mxu0 0.0
  %366 = vmatmul.mubr.f32.gmra.mrb[0].mxu0 %v100
  %v367 = vpop.f32.mrb[0].mxu0
  %v368 = vadd.f32 0.0, %v367
  %v369 = vpop.f32.mrb[0].mxu0
  %370 = vmatprep.mubr.f32.mxu0 0.0
  %371 = vmatmul.mubr.f32.gmra.mrb[0].mxu0 %v103
  %v372 = vpop.f32.mrb[0].mxu0
  %v373 = vadd.f32 0.0, %v372
  %v374 = vpop.f32.mrb[0].mxu0
  %375 = vmatprep.mubr.f32.mxu0 0.0
  %376 = vmatmul.mubr.f32.gmra.mrb[0].mxu0 %v106
  %v377 = vpop.f32.mrb[0].mxu0
  %v378 = vadd.f32 0.0, %v377
  %v379 = vpop.f32.mrb[0].mxu0
  %380 = vmatprep.mubr.f32.mxu0 0.0
  %381 = vmatmul.mubr.f32.gmra.mrb[0].mxu0 %v109
  %v382 = vpop.f32.mrb[0].mxu0
  %v383 = vadd.f32 0.0, %v382
  %v384 = vpop.f32.mrb[0].mxu0
  %385 = vmatprep.mubr.f32.mxu0 0.0
  %386 = vmatmul.mubr.f32.gmra.mrb[0].mxu0 %v112
  %v387 = vpop.f32.mrb[0].mxu0
  %v388 = vadd.f32 0.0, %v387
  %v389 = vpop.f32.mrb[0].mxu0
  %390 = vmatprep.mubr.f32.mxu0 0.0
  %391 = vmatmul.mubr.f32.gmra.mrb[0].mxu0 %v115
  %v392 = vpop.f32.mrb[0].mxu0
  %v393 = vadd.f32 0.0, %v392
  %v394 = vpop.f32.mrb[0].mxu0
  %395 = vmatprep.mubr.f32.mxu0 0.0
  %396 = vmatmul.mubr.f32.gmra.mrb[0].mxu0 %v118
  %v397 = vpop.f32.mrb[0].mxu0
  %v398 = vadd.f32 0.0, %v397
  %v399 = vpop.f32.mrb[0].mxu0
  %400 = vmatprep.mubr.f32.mxu0 0.0
  %401 = vmatmul.mubr.f32.gmra.mrb[0].mxu0 %v121
  %v402 = vpop.f32.mrb[0].mxu0
  %v403 = vadd.f32 0.0, %v402
  %v404 = vpop.f32.mrb[0].mxu0
  %405 = vmatprep.mubr.f32.mxu0 0.0
  %406 = vmatmul.mubr.f32.gmra.mrb[0].mxu0 %v124
  %v407 = vpop.f32.mrb[0].mxu0
  %v408 = vadd.f32 0.0, %v407
  %v409 = vpop.f32.mrb[0].mxu0
  %410 = vmatprep.mubr.f32.mxu0 0.0
  %411 = vmatmul.mubr.f32.gmra.mrb[0].mxu0 %v127
  %v412 = vpop.f32.mrb[0].mxu0
  %v413 = vadd.f32 0.0, %v412
  %v414 = vpop.f32.mrb[0].mxu0
  %415 = vmatprep.mubr.f32.mxu0 0.0
  %416 = vmatmul.mubr.f32.gmra.mrb[0].mxu0 %v130
  %v417 = vpop.f32.mrb[0].mxu0
  %v418 = vadd.f32 0.0, %v417
  %v419 = vpop.f32.mrb[0].mxu0
  %420 = vmatprep.mubr.f32.mxu0 0.0
  %421 = vmatmul.mubr.f32.gmra.mrb[0].mxu0 %v133
  %v422 = vpop.f32.mrb[0].mxu0
  %v423 = vadd.f32 0.0, %v422
  %v424 = vpop.f32.mrb[0].mxu0
  %425 = vmatprep.mubr.f32.mxu0 0.0
  %426 = vmatmul.mubr.f32.gmra.mrb[0].mxu0 %v136
  %v427 = vpop.f32.mrb[0].mxu0
  %v428 = vadd.f32 0.0, %v427
  %v429 = vpop.f32.mrb[0].mxu0
  %430 = vmatprep.mubr.f32.mxu0 0.0
  %431 = vmatmul.mubr.f32.gmra.mrb[0].mxu0 %v139
  %v432 = vpop.f32.mrb[0].mxu0
  %v433 = vadd.f32 0.0, %v432
  %v434 = vpop.f32.mrb[0].mxu0
  %435 = vmatprep.mubr.f32.mxu0 0.0
  %436 = vmatmul.mubr.f32.gmra.mrb[0].mxu0 %v142
  %v437 = vpop.f32.mrb[0].mxu0
  %v438 = vadd.f32 0.0, %v437
  %v439 = vpop.f32.mrb[0].mxu0
  %440 = vmatprep.mubr.f32.mxu0 0.0
  %441 = vmatmul.mubr.f32.gmra.mrb[0].mxu0 %v145
  %v442 = vpop.f32.mrb[0].mxu0
  %v443 = vadd.f32 0.0, %v442
  %v444 = vpop.f32.mrb[0].mxu0
  %445 = vmatprep.mubr.f32.mxu0 0.0
  %446 = vmatmul.mubr.f32.gmra.mrb[0].mxu0 %v148
  %v447 = vpop.f32.mrb[0].mxu0
  %v448 = vadd.f32 0.0, %v447
  %v449 = vpop.f32.mrb[0].mxu0
  %450 = vmatprep.mubr.f32.mxu0 0.0
  %451 = vmatmul.mubr.f32.gmra.mrb[0].mxu0 %v151
  %v452 = vpop.f32.mrb[0].mxu0
  %v453 = vadd.f32 0.0, %v452
  %v454 = vpop.f32.mrb[0].mxu0
  %455 = vmatprep.mubr.f32.mxu0 0.0
  %456 = vmatmul.mubr.f32.gmra.mrb[0].mxu0 %v154
  %v457 = vpop.f32.mrb[0].mxu0
  %v458 = vadd.f32 0.0, %v457
  %v459 = vpop.f32.mrb[0].mxu0
  %460 = vmatprep.mubr.f32.mxu0 0.0
  %461 = vmatmul.mubr.f32.gmra.mrb[0].mxu0 %v157
  %v462 = vpop.f32.mrb[0].mxu0
  %v463 = vadd.f32 0.0, %v462
  %v464 = vpop.f32.mrb[0].mxu0
  %465 = vmatprep.mubr.f32.mxu0 0.0
  %466 = vmatmul.mubr.f32.gmra.mrb[0].mxu0 %v160
  %v467 = vpop.f32.mrb[0].mxu0
  %v468 = vadd.f32 0.0, %v467
  %v469 = vpop.f32.mrb[0].mxu0
  %470 = vmatprep.mubr.f32.mxu0 0.0
  %471 = vmatmul.mubr.f32.gmra.mrb[0].mxu0 %v163
  %v472 = vpop.f32.mrb[0].mxu0
  %v473 = vadd.f32 0.0, %v472
  %v474 = vpop.f32.mrb[0].mxu0
  %475 = vmatprep.mubr.f32.mxu0 0.0
  %476 = vmatmul.mubr.f32.gmra.mrb[0].mxu0 %v166
  %v477 = vpop.f32.mrb[0].mxu0
  %v478 = vadd.f32 0.0, %v477
  %v479 = vpop.f32.mrb[0].mxu0
  %480 = vmatprep.mubr.f32.mxu0 0.0
  %481 = vmatmul.mubr.f32.gmra.mrb[0].mxu0 %v169
  %v482 = vpop.f32.mrb[0].mxu0
  %v483 = vadd.f32 0.0, %v482
  %v484 = vpop.f32.mrb[0].mxu0
  %485 = vmatprep.mubr.f32.mxu0 0.0
  %486 = vmatmul.mubr.f32.gmra.mrb[0].mxu0 %v172
  %v487 = vpop.f32.mrb[0].mxu0
  %v488 = vadd.f32 0.0, %v487
  %v489 = vpop.f32.mrb[0].mxu0
  %490 = vmatprep.mubr.f32.mxu0 0.0
  %491 = vmatmul.mubr.f32.gmra.mrb[0].mxu0 %v175
  %v492 = vpop.f32.mrb[0].mxu0
  %v493 = vadd.f32 0.0, %v492
  %v494 = vpop.f32.mrb[0].mxu0
  %495 = vmatprep.mubr.f32.mxu0 0.0
  %496 = vmatmul.mubr.f32.gmra.mrb[0].mxu0 %v178
  %v497 = vpop.f32.mrb[0].mxu0
  %v498 = vadd.f32 0.0, %v497
  %v499 = vpop.f32.mrb[0].mxu0
  %500 = vmatprep.mubr.f32.mxu0 0.0
  %501 = vmatmul.mubr.f32.gmra.mrb[0].mxu0 %v181
  %v502 = vpop.f32.mrb[0].mxu0
  %v503 = vadd.f32 0.0, %v502
  %v504 = vpop.f32.mrb[0].mxu0
  %505 = vmatprep.mubr.f32.mxu0 0.0
  %506 = vmatmul.mubr.f32.gmra.mrb[0].mxu0 %v184
  %v507 = vpop.f32.mrb[0].mxu0
  %v508 = vadd.f32 0.0, %v507
  %v509 = vpop.f32.mrb[0].mxu0
  %510 = vmatprep.mubr.f32.mxu0 0.0
  %511 = vmatmul.mubr.f32.gmra.mrb[0].mxu0 %v187
  %v512 = vpop.f32.mrb[0].mxu0
  %v513 = vadd.f32 0.0, %v512
  %v514 = vpop.f32.mrb[0].mxu0
  %515 = vmatprep.mubr.f32.mxu0 0.0
  %516 = vmatmul.mubr.f32.gmra.mrb[0].mxu0 %v190
  %v517 = vpop.f32.mrb[0].mxu0
  %v518 = vadd.f32 0.0, %v517
  %v519 = vpop.f32.mrb[0].mxu0
  %520 = vmatprep.mubr.f32.mxu0 0.0
  %521 = vmatmul.mubr.f32.gmra.mrb[0].mxu0 %v193
  %v522 = vpop.f32.mrb[0].mxu0
  %v523 = vadd.f32 0.0, %v522
  %v524 = vpop.f32.mrb[0].mxu0
  %525 = vmatprep.mubr.f32.mxu0 0.0
  %526 = vmatmul.mubr.f32.gmra.mrb[0].mxu0 %v196
  %v527 = vpop.f32.mrb[0].mxu0
  %v528 = vadd.f32 0.0, %v527
  %v529 = vpop.f32.mrb[0].mxu0
  %530 = vmatprep.mubr.f32.mxu0 0.0
  %531 = vmatmul.mubr.f32.gmra.mrb[0].mxu0 %v199
  %v532 = vpop.f32.mrb[0].mxu0
  %v533 = vadd.f32 0.0, %v532
  %v534 = vpop.f32.mrb[0].mxu0
  %535 = vmatprep.mubr.f32.mxu0 0.0
  %536 = vmatmul.mubr.f32.gmra.mrb[0].mxu0 %v202
  %v537 = vpop.f32.mrb[0].mxu0
  %v538 = vadd.f32 0.0, %v537
  %v539 = vpop.f32.mrb[0].mxu0
  %540 = vmatprep.mubr.f32.mxu0 0.0
  %541 = vmatmul.mubr.f32.gmra.mrb[0].mxu0 %v205
  %v542 = vpop.f32.mrb[0].mxu0
  %v543 = vadd.f32 0.0, %v542
  %v544 = vpop.f32.mrb[0].mxu0
  %545 = vmatprep.mubr.f32.mxu0 0.0
  %546 = vmatmul.mubr.f32.gmra.mrb[0].mxu0 %v208
  %v547 = vpop.f32.mrb[0].mxu0
  %v548 = vadd.f32 0.0, %v547
  %v549 = vpop.f32.mrb[0].mxu0
  %550 = vmatprep.mubr.f32.mxu0 0.0
  %551 = vmatmul.mubr.f32.gmra.mrb[0].mxu0 %v211
  %v552 = vpop.f32.mrb[0].mxu0
  %v553 = vadd.f32 0.0, %v552
  %v554 = vpop.f32.mrb[0].mxu0
  %555 = vmatprep.mubr.f32.mxu0 0.0
  %556 = vmatmul.mubr.f32.gmra.mrb[0].mxu0 %v214
  %v557 = vpop.f32.mrb[0].mxu0
  %v558 = vadd.f32 0.0, %v557
  %v559 = vpop.f32.mrb[0].mxu0
  %560 = vmatprep.mubr.f32.mxu0 0.0
  %561 = vmatmul.mubr.f32.gmra.mrb[0].mxu0 %v217
  %v562 = vpop.f32.mrb[0].mxu0
  %v563 = vadd.f32 0.0, %v562
  %v564 = vpop.f32.mrb[0].mxu0
  %565 = vmatprep.mubr.f32.mxu0 0.0
  %566 = vmatmul.mubr.f32.gmra.mrb[0].mxu0 %v220
  %v567 = vpop.f32.mrb[0].mxu0
  %v568 = vadd.f32 0.0, %v567
  %v569 = vpop.f32.mrb[0].mxu0
  %570 = vmatprep.mubr.f32.mxu0 0.0
  %571 = vmatmul.mubr.f32.gmra.mrb[0].mxu0 %v223
  %v572 = vpop.f32.mrb[0].mxu0
  %v573 = vadd.f32 0.0, %v572
  %v574 = vpop.f32.mrb[0].mxu0
  %575 = vmatprep.mubr.f32.mxu0 0.0
  %576 = vmatmul.mubr.f32.gmra.mrb[0].mxu0 %v226
  %v577 = vpop.f32.mrb[0].mxu0
  %v578 = vadd.f32 0.0, %v577
  %v579 = vpop.f32.mrb[0].mxu0
  %580 = vmatprep.mubr.f32.mxu0 0.0
  %581 = vmatmul.mubr.f32.gmra.mrb[0].mxu0 %v229
  %v582 = vpop.f32.mrb[0].mxu0
  %v583 = vadd.f32 0.0, %v582
  %v584 = vpop.f32.mrb[0].mxu0
  %585 = vmatprep.mubr.f32.mxu0 0.0
  %586 = vmatmul.mubr.f32.gmra.mrb[0].mxu0 %v232
  %v587 = vpop.f32.mrb[0].mxu0
  %v588 = vadd.f32 0.0, %v587
  %v589 = vpop.f32.mrb[0].mxu0
  %590 = vmatprep.mubr.f32.mxu0 0.0
  %591 = vmatmul.mubr.f32.gmra.mrb[0].mxu0 %v235
  %v592 = vpop.f32.mrb[0].mxu0
  %v593 = vadd.f32 0.0, %v592
  %v594 = vpop.f32.mrb[0].mxu0
  %595 = vmatprep.mubr.f32.mxu0 0.0
  %596 = vmatmul.mubr.f32.gmra.mrb[0].mxu0 %v238
  %v597 = vpop.f32.mrb[0].mxu0
  %v598 = vadd.f32 0.0, %v597
  %v599 = vpop.f32.mrb[0].mxu0
  %600 = vmatprep.mubr.f32.mxu0 0.0
  %601 = vmatmul.mubr.f32.gmra.mrb[0].mxu0 %v241
  %v602 = vpop.f32.mrb[0].mxu0
  %v603 = vadd.f32 0.0, %v602
  %v604 = vpop.f32.mrb[0].mxu0
  %605 = vmatprep.mubr.f32.mxu0 0.0
  %606 = vmatmul.mubr.f32.gmra.mrb[0].mxu0 %v244
  %v607 = vpop.f32.mrb[0].mxu0
  %v608 = vadd.f32 0.0, %v607
  %v609 = vpop.f32.mrb[0].mxu0
  %610 = vmatprep.mubr.f32.mxu0 0.0
  %611 = vmatmul.mubr.f32.gmra.mrb[0].mxu0 %v247
  %v612 = vpop.f32.mrb[0].mxu0
  %v613 = vadd.f32 0.0, %v612
  %v614 = vpop.f32.mrb[0].mxu0
  %615 = vmatprep.mubr.f32.mxu0 0.0
  %616 = vmatmul.mubr.f32.gmra.mrb[0].mxu0 %v250
  %v617 = vpop.f32.mrb[0].mxu0
  %v618 = vadd.f32 0.0, %v617
  %v619 = vpop.f32.mrb[0].mxu0
  %620 = vmatprep.mubr.f32.mxu0 0.0
  %621 = vmatmul.mubr.f32.gmra.mrb[0].mxu0 %v253
  %v622 = vpop.f32.mrb[0].mxu0
  %v623 = vadd.f32 0.0, %v622
  %v624 = vpop.f32.mrb[0].mxu0
  %625 = vmatprep.mubr.f32.mxu0 0.0
  %626 = vmatmul.mubr.f32.gmra.mrb[0].mxu0 %v256
  %v627 = vpop.f32.mrb[0].mxu0
  %v628 = vadd.f32 0.0, %v627
  %v629 = vpop.f32.mrb[0].mxu0
  %630 = vmatprep.mubr.f32.mxu0 0.0
  %631 = vmatmul.mubr.f32.gmra.mrb[0].mxu0 %v259
  %v632 = vpop.f32.mrb[0].mxu0
  %v633 = vadd.f32 0.0, %v632
  %v634 = vpop.f32.mrb[0].mxu0
  %635 = vmatprep.mubr.f32.mxu0 0.0
  %636 = vmatmul.mubr.f32.gmra.mrb[0].mxu0 %v262
  %v637 = vpop.f32.mrb[0].mxu0
  %v638 = vadd.f32 0.0, %v637
  %v639 = vpop.f32.mrb[0].mxu0
  %640 = vmatprep.mubr.f32.mxu0 0.0
  %641 = vmatmul.mubr.f32.gmra.mrb[0].mxu0 %v265
  %v642 = vpop.f32.mrb[0].mxu0
  %v643 = vadd.f32 0.0, %v642
  %v644 = vpop.f32.mrb[0].mxu0
  %645 = vmatprep.mubr.f32.mxu0 0.0
  %646 = vmatmul.mubr.f32.gmra.mrb[0].mxu0 %v268
  %v647 = vpop.f32.mrb[0].mxu0
  %v648 = vadd.f32 0.0, %v647
  %v649 = vpop.f32.mrb[0].mxu0
  %650 = vmatprep.mubr.f32.mxu0 0.0
  %651 = vmatmul.mubr.f32.gmra.mrb[0].mxu0 %v271
  %v652 = vpop.f32.mrb[0].mxu0
  %v653 = vadd.f32 0.0, %v652
  %v654 = vpop.f32.mrb[0].mxu0
  %655 = vmatprep.mubr.f32.mxu0 0.0
  %656 = vmatmul.mubr.f32.gmra.mrb[0].mxu0 %v274
  %v657 = vpop.f32.mrb[0].mxu0
  %v658 = vadd.f32 0.0, %v657
  %v659 = vpop.f32.mrb[0].mxu0
  %660 = vdwg.mxu0
  %v661 = vadd.f32 %v343, %v348
  %v662 = vadd.f32 %v661, %v353
  %v663 = vadd.f32 %v662, %v358
  %v664 = vadd.f32 %v663, %v363
  %v665 = vadd.f32 %v664, %v368
  %v666 = vadd.f32 %v665, %v373
  %v667 = vadd.f32 %v666, %v378
  %v668 = vadd.f32 %v667, %v383
  %v669 = vadd.f32 %v668, %v388
  %v670 = vadd.f32 %v669, %v393
  %v671 = vadd.f32 %v670, %v398
  %v672 = vadd.f32 %v671, %v403
  %v673 = vadd.f32 %v672, %v408
  %v674 = vadd.f32 %v673, %v413
  %v675 = vadd.f32 %v674, %v418
  %v676 = vadd.f32 %v675, %v423
  %v677 = vadd.f32 %v676, %v428
  %v678 = vadd.f32 %v677, %v433
  %v679 = vadd.f32 %v678, %v438
  %v680 = vadd.f32 %v679, %v443
  %v681 = vadd.f32 %v680, %v448
  %v682 = vadd.f32 %v681, %v453
  %v683 = vadd.f32 %v682, %v458
  %v684 = vadd.f32 %v683, %v463
  %v685 = vadd.f32 %v684, %v468
  %v686 = vadd.f32 %v685, %v473
  %v687 = vadd.f32 %v686, %v478
  %v688 = vadd.f32 %v687, %v483
  %v689 = vadd.f32 %v688, %v488
  %v690 = vadd.f32 %v689, %v493
  %v691 = vadd.f32 %v690, %v498
  %v692 = vadd.f32 %v691, %v503
  %v693 = vadd.f32 %v692, %v508
  %v694 = vadd.f32 %v693, %v513
  %v695 = vadd.f32 %v694, %v518
  %v696 = vadd.f32 %v695, %v523
  %v697 = vadd.f32 %v696, %v528
  %v698 = vadd.f32 %v697, %v533
  %v699 = vadd.f32 %v698, %v538
  %v700 = vadd.f32 %v699, %v543
  %v701 = vadd.f32 %v700, %v548
  %v702 = vadd.f32 %v701, %v553
  %v703 = vadd.f32 %v702, %v558
  %v704 = vadd.f32 %v703, %v563
  %v705 = vadd.f32 %v704, %v568
  %v706 = vadd.f32 %v705, %v573
  %v707 = vadd.f32 %v706, %v578
  %v708 = vadd.f32 %v707, %v583
  %v709 = vadd.f32 %v708, %v588
  %v710 = vadd.f32 %v709, %v593
  %v711 = vadd.f32 %v710, %v598
  %v712 = vadd.f32 %v711, %v603
  %v713 = vadd.f32 %v712, %v608
  %v714 = vadd.f32 %v713, %v613
  %v715 = vadd.f32 %v714, %v618
  %v716 = vadd.f32 %v715, %v623
  %v717 = vadd.f32 %v716, %v628
  %v718 = vadd.f32 %v717, %v633
  %v719 = vadd.f32 %v718, %v638
  %v720 = vadd.f32 %v719, %v643
  %v721 = vadd.f32 %v720, %v648
  %v722 = vadd.f32 %v721, %v653
  %v723 = vadd.f32 %v722, %v658
  %v724 = vrot.slane %v723, 4
  %v725 = vadd.f32 %v723, %v724
  %v726 = vrot.slane %v725, 2
  %v727 = vadd.f32 %v725, %v726
  %v728 = vrot.slane %v727, 1
  %v729 = vadd.f32 %v727, %v728
  %v730 = vmul.f32 %v729, 0.001953125
  %v731 = vmul.f32 %v343, %v343
  %v732 = vmul.f32 %v348, %v348
  %v733 = vmul.f32 %v353, %v353
  %v734 = vmul.f32 %v358, %v358
  %v735 = vmul.f32 %v363, %v363
  %v736 = vmul.f32 %v368, %v368
  %v737 = vmul.f32 %v373, %v373
  %v738 = vmul.f32 %v378, %v378
  %v739 = vmul.f32 %v383, %v383
  %v740 = vmul.f32 %v388, %v388
  %v741 = vmul.f32 %v393, %v393
  %v742 = vmul.f32 %v398, %v398
  %v743 = vmul.f32 %v403, %v403
  %v744 = vmul.f32 %v408, %v408
  %v745 = vmul.f32 %v413, %v413
  %v746 = vmul.f32 %v418, %v418
  %v747 = vmul.f32 %v423, %v423
  %v748 = vmul.f32 %v428, %v428
  %v749 = vmul.f32 %v433, %v433
  %v750 = vmul.f32 %v438, %v438
  %v751 = vmul.f32 %v443, %v443
  %v752 = vmul.f32 %v448, %v448
  %v753 = vmul.f32 %v453, %v453
  %v754 = vmul.f32 %v458, %v458
  %v755 = vmul.f32 %v463, %v463
  %v756 = vmul.f32 %v468, %v468
  %v757 = vmul.f32 %v473, %v473
  %v758 = vmul.f32 %v478, %v478
  %v759 = vmul.f32 %v483, %v483
  %v760 = vmul.f32 %v488, %v488
  %v761 = vmul.f32 %v493, %v493
  %v762 = vmul.f32 %v498, %v498
  %v763 = vmul.f32 %v503, %v503
  %v764 = vmul.f32 %v508, %v508
  %v765 = vmul.f32 %v513, %v513
  %v766 = vmul.f32 %v518, %v518
  %v767 = vmul.f32 %v523, %v523
  %v768 = vmul.f32 %v528, %v528
  %v769 = vmul.f32 %v533, %v533
  %v770 = vmul.f32 %v538, %v538
  %v771 = vmul.f32 %v543, %v543
  %v772 = vmul.f32 %v548, %v548
  %v773 = vmul.f32 %v553, %v553
  %v774 = vmul.f32 %v558, %v558
  %v775 = vmul.f32 %v563, %v563
  %v776 = vmul.f32 %v568, %v568
  %v777 = vmul.f32 %v573, %v573
  %v778 = vmul.f32 %v578, %v578
  %v779 = vmul.f32 %v583, %v583
  %v780 = vmul.f32 %v588, %v588
  %v781 = vmul.f32 %v593, %v593
  %v782 = vmul.f32 %v598, %v598
  %v783 = vmul.f32 %v603, %v603
  %v784 = vmul.f32 %v608, %v608
  %v785 = vmul.f32 %v613, %v613
  %v786 = vmul.f32 %v618, %v618
  %v787 = vmul.f32 %v623, %v623
  %v788 = vmul.f32 %v628, %v628
  %v789 = vmul.f32 %v633, %v633
  %v790 = vmul.f32 %v638, %v638
  %v791 = vmul.f32 %v643, %v643
  %v792 = vmul.f32 %v648, %v648
  %v793 = vmul.f32 %v653, %v653
  %v794 = vmul.f32 %v658, %v658
  %v795 = vadd.f32 %v731, %v732
  %v796 = vadd.f32 %v795, %v733
  %v797 = vadd.f32 %v796, %v734
  %v798 = vadd.f32 %v797, %v735
  %v799 = vadd.f32 %v798, %v736
  %v800 = vadd.f32 %v799, %v737
  %v801 = vadd.f32 %v800, %v738
  %v802 = vadd.f32 %v801, %v739
  %v803 = vadd.f32 %v802, %v740
  %v804 = vadd.f32 %v803, %v741
  %v805 = vadd.f32 %v804, %v742
  %v806 = vadd.f32 %v805, %v743
  %v807 = vadd.f32 %v806, %v744
  %v808 = vadd.f32 %v807, %v745
  %v809 = vadd.f32 %v808, %v746
  %v810 = vadd.f32 %v809, %v747
  %v811 = vadd.f32 %v810, %v748
  %v812 = vadd.f32 %v811, %v749
  %v813 = vadd.f32 %v812, %v750
  %v814 = vadd.f32 %v813, %v751
  %v815 = vadd.f32 %v814, %v752
  %v816 = vadd.f32 %v815, %v753
  %v817 = vadd.f32 %v816, %v754
  %v818 = vadd.f32 %v817, %v755
  %v819 = vadd.f32 %v818, %v756
  %v820 = vadd.f32 %v819, %v757
  %v821 = vadd.f32 %v820, %v758
  %v822 = vadd.f32 %v821, %v759
  %v823 = vadd.f32 %v822, %v760
  %v824 = vadd.f32 %v823, %v761
  %v825 = vadd.f32 %v824, %v762
  %v826 = vadd.f32 %v825, %v763
  %v827 = vadd.f32 %v826, %v764
  %v828 = vadd.f32 %v827, %v765
  %v829 = vadd.f32 %v828, %v766
  %v830 = vadd.f32 %v829, %v767
  %v831 = vadd.f32 %v830, %v768
  %v832 = vadd.f32 %v831, %v769
  %v833 = vadd.f32 %v832, %v770
  %v834 = vadd.f32 %v833, %v771
  %v835 = vadd.f32 %v834, %v772
  %v836 = vadd.f32 %v835, %v773
  %v837 = vadd.f32 %v836, %v774
  %v838 = vadd.f32 %v837, %v775
  %v839 = vadd.f32 %v838, %v776
  %v840 = vadd.f32 %v839, %v777
  %v841 = vadd.f32 %v840, %v778
  %v842 = vadd.f32 %v841, %v779
  %v843 = vadd.f32 %v842, %v780
  %v844 = vadd.f32 %v843, %v781
  %v845 = vadd.f32 %v844, %v782
  %v846 = vadd.f32 %v845, %v783
  %v847 = vadd.f32 %v846, %v784
  %v848 = vadd.f32 %v847, %v785
  %v849 = vadd.f32 %v848, %v786
  %v850 = vadd.f32 %v849, %v787
  %v851 = vadd.f32 %v850, %v788
  %v852 = vadd.f32 %v851, %v789
  %v853 = vadd.f32 %v852, %v790
  %v854 = vadd.f32 %v853, %v791
  %v855 = vadd.f32 %v854, %v792
  %v856 = vadd.f32 %v855, %v793
  %v857 = vadd.f32 %v856, %v794
  %v858 = vrot.slane %v857, 4
  %v859 = vadd.f32 %v857, %v858
  %v860 = vrot.slane %v859, 2
  %v861 = vadd.f32 %v859, %v860
  %v862 = vrot.slane %v861, 1
  %v863 = vadd.f32 %v861, %v862
  %v864 = vmul.f32 %v863, 0.001953125
  %v865 = vmul.f32 %v730, %v730
  %v866 = vsub.f32 %v864, %v865
  %v867 = vmax.f32 %v866, 0.0
  %v868 = vld [vmem:[%s2] sm:$0x1]
  %v869 = vadd.f32 %v867, 1e-05
  %v870 = vrsqrt.pop %v869
  %v871 = vmul.f32 %v868, %v870
  %v872 = vld [vmem:[%s2 + $0x1] sm:$0x1]
  %v873 = vmul.f32 %v730, %v871
  %v874 = vsub.f32 %v872, %v873
  %v875 = vlaneseq
  %v876 = vshrl.u32 %v875, 7
  %v877 = vsub.s32 0, %v876
  %v878 = vrot.slane %v871, %v877
  %v879 = vmul.f32 %v343, %v878
  %v880 = vmul.f32 %v348, %v878
  %v881 = vmul.f32 %v353, %v878
  %v882 = vmul.f32 %v358, %v878
  %v883 = vmul.f32 %v363, %v878
  %v884 = vmul.f32 %v368, %v878
  %v885 = vmul.f32 %v373, %v878
  %v886 = vmul.f32 %v378, %v878
  %v887 = vmul.f32 %v383, %v878
  %v888 = vmul.f32 %v388, %v878
  %v889 = vmul.f32 %v393, %v878
  %v890 = vmul.f32 %v398, %v878
  %v891 = vmul.f32 %v403, %v878
  %v892 = vmul.f32 %v408, %v878
  %v893 = vmul.f32 %v413, %v878
  %v894 = vmul.f32 %v418, %v878
  %v895 = vmul.f32 %v423, %v878
  %v896 = vmul.f32 %v428, %v878
  %v897 = vmul.f32 %v433, %v878
  %v898 = vmul.f32 %v438, %v878
  %v899 = vmul.f32 %v443, %v878
  %v900 = vmul.f32 %v448, %v878
  %v901 = vmul.f32 %v453, %v878
  %v902 = vmul.f32 %v458, %v878
  %v903 = vmul.f32 %v463, %v878
  %v904 = vmul.f32 %v468, %v878
  %v905 = vmul.f32 %v473, %v878
  %v906 = vmul.f32 %v478, %v878
  %v907 = vmul.f32 %v483, %v878
  %v908 = vmul.f32 %v488, %v878
  %v909 = vmul.f32 %v493, %v878
  %v910 = vmul.f32 %v498, %v878
  %v911 = vmul.f32 %v503, %v878
  %v912 = vmul.f32 %v508, %v878
  %v913 = vmul.f32 %v513, %v878
  %v914 = vmul.f32 %v518, %v878
  %v915 = vmul.f32 %v523, %v878
  %v916 = vmul.f32 %v528, %v878
  %v917 = vmul.f32 %v533, %v878
  %v918 = vmul.f32 %v538, %v878
  %v919 = vmul.f32 %v543, %v878
  %v920 = vmul.f32 %v548, %v878
  %v921 = vmul.f32 %v553, %v878
  %v922 = vmul.f32 %v558, %v878
  %v923 = vmul.f32 %v563, %v878
  %v924 = vmul.f32 %v568, %v878
  %v925 = vmul.f32 %v573, %v878
  %v926 = vmul.f32 %v578, %v878
  %v927 = vmul.f32 %v583, %v878
  %v928 = vmul.f32 %v588, %v878
  %v929 = vmul.f32 %v593, %v878
  %v930 = vmul.f32 %v598, %v878
  %v931 = vmul.f32 %v603, %v878
  %v932 = vmul.f32 %v608, %v878
  %v933 = vmul.f32 %v613, %v878
  %v934 = vmul.f32 %v618, %v878
  %v935 = vmul.f32 %v623, %v878
  %v936 = vmul.f32 %v628, %v878
  %v937 = vmul.f32 %v633, %v878
  %v938 = vmul.f32 %v638, %v878
  %v939 = vmul.f32 %v643, %v878
  %v940 = vmul.f32 %v648, %v878
  %v941 = vmul.f32 %v653, %v878
  %v942 = vmul.f32 %v658, %v878
  %v943 = vlaneseq
  %v944 = vshrl.u32 %v943, 7
  %v945 = vsub.s32 0, %v944
  %v946 = vrot.slane %v874, %v945
  %v947 = vadd.f32 %v879, %v946
  %v948 = vadd.f32 %v880, %v946
  %v949 = vadd.f32 %v881, %v946
  %v950 = vadd.f32 %v882, %v946
  %v951 = vadd.f32 %v883, %v946
  %v952 = vadd.f32 %v884, %v946
  %v953 = vadd.f32 %v885, %v946
  %v954 = vadd.f32 %v886, %v946
  %v955 = vadd.f32 %v887, %v946
  %v956 = vadd.f32 %v888, %v946
  %v957 = vadd.f32 %v889, %v946
  %v958 = vadd.f32 %v890, %v946
  %v959 = vadd.f32 %v891, %v946
  %v960 = vadd.f32 %v892, %v946
  %v961 = vadd.f32 %v893, %v946
  %v962 = vadd.f32 %v894, %v946
  %v963 = vadd.f32 %v895, %v946
  %v964 = vadd.f32 %v896, %v946
  %v965 = vadd.f32 %v897, %v946
  %v966 = vadd.f32 %v898, %v946
  %v967 = vadd.f32 %v899, %v946
  %v968 = vadd.f32 %v900, %v946
  %v969 = vadd.f32 %v901, %v946
  %v970 = vadd.f32 %v902, %v946
  %v971 = vadd.f32 %v903, %v946
  %v972 = vadd.f32 %v904, %v946
  %v973 = vadd.f32 %v905, %v946
  %v974 = vadd.f32 %v906, %v946
  %v975 = vadd.f32 %v907, %v946
  %v976 = vadd.f32 %v908, %v946
  %v977 = vadd.f32 %v909, %v946
  %v978 = vadd.f32 %v910, %v946
  %v979 = vadd.f32 %v911, %v946
  %v980 = vadd.f32 %v912, %v946
  %v981 = vadd.f32 %v913, %v946
  %v982 = vadd.f32 %v914, %v946
  %v983 = vadd.f32 %v915, %v946
  %v984 = vadd.f32 %v916, %v946
  %v985 = vadd.f32 %v917, %v946
  %v986 = vadd.f32 %v918, %v946
  %v987 = vadd.f32 %v919, %v946
  %v988 = vadd.f32 %v920, %v946
  %v989 = vadd.f32 %v921, %v946
  %v990 = vadd.f32 %v922, %v946
  %v991 = vadd.f32 %v923, %v946
  %v992 = vadd.f32 %v924, %v946
  %v993 = vadd.f32 %v925, %v946
  %v994 = vadd.f32 %v926, %v946
  %v995 = vadd.f32 %v927, %v946
  %v996 = vadd.f32 %v928, %v946
  %v997 = vadd.f32 %v929, %v946
  %v998 = vadd.f32 %v930, %v946
  %v999 = vadd.f32 %v931, %v946
  %v1000 = vadd.f32 %v932, %v946
  %v1001 = vadd.f32 %v933, %v946
  %v1002 = vadd.f32 %v934, %v946
  %v1003 = vadd.f32 %v935, %v946
  %v1004 = vadd.f32 %v936, %v946
  %v1005 = vadd.f32 %v937, %v946
  %v1006 = vadd.f32 %v938, %v946
  %v1007 = vadd.f32 %v939, %v946
  %v1008 = vadd.f32 %v940, %v946
  %v1009 = vadd.f32 %v941, %v946
  %v1010 = vadd.f32 %v942, %v946
  %v1011 = vmax.f32 %v947, 0.0
  %v1012 = vmax.f32 %v948, 0.0
  %v1013 = vmax.f32 %v949, 0.0
  %v1014 = vmax.f32 %v950, 0.0
  %v1015 = vmax.f32 %v951, 0.0
  %v1016 = vmax.f32 %v952, 0.0
  %v1017 = vmax.f32 %v953, 0.0
  %v1018 = vmax.f32 %v954, 0.0
  %v1019 = vmax.f32 %v955, 0.0
  %v1020 = vmax.f32 %v956, 0.0
  %v1021 = vmax.f32 %v957, 0.0
  %v1022 = vmax.f32 %v958, 0.0
  %v1023 = vmax.f32 %v959, 0.0
  %v1024 = vmax.f32 %v960, 0.0
  %v1025 = vmax.f32 %v961, 0.0
  %v1026 = vmax.f32 %v962, 0.0
  %v1027 = vmax.f32 %v963, 0.0
  %v1028 = vmax.f32 %v964, 0.0
  %v1029 = vmax.f32 %v965, 0.0
  %v1030 = vmax.f32 %v966, 0.0
  %v1031 = vmax.f32 %v967, 0.0
  %v1032 = vmax.f32 %v968, 0.0
  %v1033 = vmax.f32 %v969, 0.0
  %v1034 = vmax.f32 %v970, 0.0
  %v1035 = vmax.f32 %v971, 0.0
  %v1036 = vmax.f32 %v972, 0.0
  %v1037 = vmax.f32 %v973, 0.0
  %v1038 = vmax.f32 %v974, 0.0
  %v1039 = vmax.f32 %v975, 0.0
  %v1040 = vmax.f32 %v976, 0.0
  %v1041 = vmax.f32 %v977, 0.0
  %v1042 = vmax.f32 %v978, 0.0
  %v1043 = vmax.f32 %v979, 0.0
  %v1044 = vmax.f32 %v980, 0.0
  %v1045 = vmax.f32 %v981, 0.0
  %v1046 = vmax.f32 %v982, 0.0
  %v1047 = vmax.f32 %v983, 0.0
  %v1048 = vmax.f32 %v984, 0.0
  %v1049 = vmax.f32 %v985, 0.0
  %v1050 = vmax.f32 %v986, 0.0
  %v1051 = vmax.f32 %v987, 0.0
  %v1052 = vmax.f32 %v988, 0.0
  %v1053 = vmax.f32 %v989, 0.0
  %v1054 = vmax.f32 %v990, 0.0
  %v1055 = vmax.f32 %v991, 0.0
  %v1056 = vmax.f32 %v992, 0.0
  %v1057 = vmax.f32 %v993, 0.0
  %v1058 = vmax.f32 %v994, 0.0
  %v1059 = vmax.f32 %v995, 0.0
  %v1060 = vmax.f32 %v996, 0.0
  %v1061 = vmax.f32 %v997, 0.0
  %v1062 = vmax.f32 %v998, 0.0
  %v1063 = vmax.f32 %v999, 0.0
  %v1064 = vmax.f32 %v1000, 0.0
  %v1065 = vmax.f32 %v1001, 0.0
  %v1066 = vmax.f32 %v1002, 0.0
  %v1067 = vmax.f32 %v1003, 0.0
  %v1068 = vmax.f32 %v1004, 0.0
  %v1069 = vmax.f32 %v1005, 0.0
  %v1070 = vmax.f32 %v1006, 0.0
  %v1071 = vmax.f32 %v1007, 0.0
  %v1072 = vmax.f32 %v1008, 0.0
  %v1073 = vmax.f32 %v1009, 0.0
  %v1074 = vmax.f32 %v1010, 0.0
  %1075 = vst [vmem:[%s3] sm:$0xff] %v1011
  %1076 = vst [vmem:[%s3 + $0x8] sm:$0xff] %v1012
  %1077 = vst [vmem:[%s3 + $0x10] sm:$0xff] %v1013
  %1078 = vst [vmem:[%s3 + $0x18] sm:$0xff] %v1014
  %1079 = vst [vmem:[%s3 + $0x20] sm:$0xff] %v1015
  %1080 = vst [vmem:[%s3 + $0x28] sm:$0xff] %v1016
  %1081 = vst [vmem:[%s3 + $0x30] sm:$0xff] %v1017
  %1082 = vst [vmem:[%s3 + $0x38] sm:$0xff] %v1018
  %1083 = vst [vmem:[%s3 + $0x40] sm:$0xff] %v1019
  %1084 = vst [vmem:[%s3 + $0x48] sm:$0xff] %v1020
  %1085 = vst [vmem:[%s3 + $0x50] sm:$0xff] %v1021
  %1086 = vst [vmem:[%s3 + $0x58] sm:$0xff] %v1022
  %1087 = vst [vmem:[%s3 + $0x60] sm:$0xff] %v1023
  %1088 = vst [vmem:[%s3 + $0x68] sm:$0xff] %v1024
  %1089 = vst [vmem:[%s3 + $0x70] sm:$0xff] %v1025
  %1090 = vst [vmem:[%s3 + $0x78] sm:$0xff] %v1026
  %1091 = vst [vmem:[%s3 + $0x80] sm:$0xff] %v1027
  %1092 = vst [vmem:[%s3 + $0x88] sm:$0xff] %v1028
  %1093 = vst [vmem:[%s3 + $0x90] sm:$0xff] %v1029
  %1094 = vst [vmem:[%s3 + $0x98] sm:$0xff] %v1030
  %1095 = vst [vmem:[%s3 + $0xa0] sm:$0xff] %v1031
  %1096 = vst [vmem:[%s3 + $0xa8] sm:$0xff] %v1032
  %1097 = vst [vmem:[%s3 + $0xb0] sm:$0xff] %v1033
  %1098 = vst [vmem:[%s3 + $0xb8] sm:$0xff] %v1034
  %1099 = vst [vmem:[%s3 + $0xc0] sm:$0xff] %v1035
  %1100 = vst [vmem:[%s3 + $0xc8] sm:$0xff] %v1036
  %1101 = vst [vmem:[%s3 + $0xd0] sm:$0xff] %v1037
  %1102 = vst [vmem:[%s3 + $0xd8] sm:$0xff] %v1038
  %1103 = vst [vmem:[%s3 + $0xe0] sm:$0xff] %v1039
  %1104 = vst [vmem:[%s3 + $0xe8] sm:$0xff] %v1040
  %1105 = vst [vmem:[%s3 + $0xf0] sm:$0xff] %v1041
  %1106 = vst [vmem:[%s3 + $0xf8] sm:$0xff] %v1042
  %1107 = vst [vmem:[%s3 + $0x100] sm:$0xff] %v1043
  %1108 = vst [vmem:[%s3 + $0x108] sm:$0xff] %v1044
  %1109 = vst [vmem:[%s3 + $0x110] sm:$0xff] %v1045
  %1110 = vst [vmem:[%s3 + $0x118] sm:$0xff] %v1046
  %1111 = vst [vmem:[%s3 + $0x120] sm:$0xff] %v1047
  %1112 = vst [vmem:[%s3 + $0x128] sm:$0xff] %v1048
  %1113 = vst [vmem:[%s3 + $0x130] sm:$0xff] %v1049
  %1114 = vst [vmem:[%s3 + $0x138] sm:$0xff] %v1050
  %1115 = vst [vmem:[%s3 + $0x140] sm:$0xff] %v1051
  %1116 = vst [vmem:[%s3 + $0x148] sm:$0xff] %v1052
  %1117 = vst [vmem:[%s3 + $0x150] sm:$0xff] %v1053
  %1118 = vst [vmem:[%s3 + $0x158] sm:$0xff] %v1054
  %1119 = vst [vmem:[%s3 + $0x160] sm:$0xff] %v1055
  %1120 = vst [vmem:[%s3 + $0x168] sm:$0xff] %v1056
  %1121 = vst [vmem:[%s3 + $0x170] sm:$0xff] %v1057
  %1122 = vst [vmem:[%s3 + $0x178] sm:$0xff] %v1058
  %1123 = vst [vmem:[%s3 + $0x180] sm:$0xff] %v1059
  %1124 = vst [vmem:[%s3 + $0x188] sm:$0xff] %v1060
  %1125 = vst [vmem:[%s3 + $0x190] sm:$0xff] %v1061
  %1126 = vst [vmem:[%s3 + $0x198] sm:$0xff] %v1062
  %1127 = vst [vmem:[%s3 + $0x1a0] sm:$0xff] %v1063
  %1128 = vst [vmem:[%s3 + $0x1a8] sm:$0xff] %v1064
  %1129 = vst [vmem:[%s3 + $0x1b0] sm:$0xff] %v1065
  %1130 = vst [vmem:[%s3 + $0x1b8] sm:$0xff] %v1066
  %1131 = vst [vmem:[%s3 + $0x1c0] sm:$0xff] %v1067
  %1132 = vst [vmem:[%s3 + $0x1c8] sm:$0xff] %v1068
  %1133 = vst [vmem:[%s3 + $0x1d0] sm:$0xff] %v1069
  %1134 = vst [vmem:[%s3 + $0x1d8] sm:$0xff] %v1070
  %1135 = vst [vmem:[%s3 + $0x1e0] sm:$0xff] %v1071
  %1136 = vst [vmem:[%s3 + $0x1e8] sm:$0xff] %v1072
  %1137 = vst [vmem:[%s3 + $0x1f0] sm:$0xff] %v1073
  %1138 = vst [vmem:[%s3 + $0x1f8] sm:$0xff] %v1074
  // Predicated region
  $region14: #{single_conv_block.1} parent=0 // pred_check
    _
  $region15: #{single_conv_block.1} parent=0 // pred_check_branch
    %1140 = sbr.rel (0) target = $region17
  $region16: #{single_conv_block.1} parent=0 // pred_region
    _
  $region17: #{single_conv_block.1} parent=0 // pred_fallthru
    _
  // Predicated region
  $region18: #{single_conv_block.1} parent=0 // pred_check
    _
  $region19: #{single_conv_block.1} parent=0 // pred_check_branch
    %1142 = sbr.rel (0) target = $region21
  $region20: #{single_conv_block.1} parent=0 // pred_region
    _
  $region21: #{single_conv_block.1} parent=0 // pred_fallthru
    _

</llo_original>
